<compile_context>
chip_gen: v6e
topology: v6e:2x2x1
jax: 0.10.0
libtpu: 0.0.40
codegen_flags: <defaults>
</compile_context>

<pallas_src>
import functools
import math

import jax
import jax.numpy as jnp
from jax.experimental import pallas as pl
from jax.experimental.pallas import tpu as pltpu

_TILE_BYTES = 4 * 1024 * 1024   # per-input VMEM tile byte budget


def _round_up(x, m):
    return ((x + m - 1) // m) * m


def _sq_diff_partial_kernel(pred_ref, tgt_ref, part_ref, acc_ref, *,
                            n_rows, n_cols, tm, tc, mask_rows, mask_cols):
    """Accumulate sum((pred - tgt)^2) into per-row-block partial sums.

    Grid is (row_blocks, col_blocks); the column axis is the reduction
    ("arbitrary") axis.  acc_ref is a small (8, tc) f32 accumulator.  Only
    edge blocks pay for OOB masking; interior blocks take an unmasked path.
    """
    i = pl.program_id(0)
    j = pl.program_id(1)
    last_i = pl.num_programs(0) - 1
    last_j = pl.num_programs(1) - 1

    @pl.when(j == 0)
    def _():
        acc_ref[...] = jnp.zeros_like(acc_ref)

    d = pred_ref[...].astype(jnp.float32) - tgt_ref[...].astype(jnp.float32)
    sq = d * d

    def _accum(x):
        # (tm, tc) -> (tm//8, 8, tc); the leading-axis sum is pure vreg adds
        # (no cross-lane work) and the live accumulator stays one (8, tc) slab.
        acc_ref[...] += x.reshape(tm // 8, 8, tc).sum(axis=0)

    if mask_rows or mask_cols:
        if mask_rows and mask_cols:
            edge = jnp.logical_or(i == last_i, j == last_j)
        elif mask_rows:
            edge = i == last_i
        else:
            edge = j == last_j

        @pl.when(edge)
        def _():
            # OOB parts of edge blocks hold garbage and must be zeroed.
            valid = None
            if mask_rows:
                rows = i * tm + jax.lax.broadcasted_iota(jnp.int32, (tm, tc), 0)
                valid = rows < n_rows
            if mask_cols:
                cols = j * tc + jax.lax.broadcasted_iota(jnp.int32, (tm, tc), 1)
                cmask = cols < n_cols
                valid = cmask if valid is None else (valid & cmask)
            _accum(jnp.where(valid, sq, 0.0))

        @pl.when(jnp.logical_not(edge))
        def _():
            _accum(sq)                      # interior fast path: no mask ops
    else:
        _accum(sq)

    @pl.when(j == last_j)
    def _():
        # (8, tc) -> (1, 1, tc): one cross-sublane reduce per row block.
        part_ref[...] = jnp.sum(acc_ref[...], axis=0, keepdims=True)[None]


def _choose_split(shape, itemsize):
    """Pick a free (reshape-only) 2D factorization (rows, cols) of the data.

    Scores each split of the dim sequence by valid elements per tile (primary),
    then by whether it yields >= 2 row blocks (megacore) and >= 128 columns
    (lane fill), then by row count.
    """
    dims = [int(d) for d in shape]
    if len(dims) <= 1:
        n = dims[0] if dims else 1
        return 1, max(n, 1)
    target_elems = max(1024, _TILE_BYTES // itemsize)
    best, best_key = None, None
    for k in range(1, len(dims)):
        rows = math.prod(dims[:k])
        cols = math.prod(dims[k:])
        tc = min(max(_round_up(cols, 128), 128), 2048)
        tm_cap = max(8, (target_elems // tc) // 8 * 8)
        tm = min(_round_up(rows, 8), tm_cap)
        valid_per_tile = min(tm, rows) * min(tc, cols)
        row_blocks = -(-rows // max(tm, 1))
        key = (valid_per_tile, row_blocks >= 2, cols >= 128, rows)
        if best_key is None or key > best_key:
            best_key, best = key, (rows, cols)
    return best


@functools.partial(jax.jit, static_argnames=("block_rows", "block_cols"))
def _mse_mean_2d(pred2, tgt2, block_rows=None, block_cols=None):
    R, C = pred2.shape
    isz = min(pred2.dtype.itemsize, tgt2.dtype.itemsize)
    sub = max(8, 32 // isz)          # sublane multiple: 8 f32, 16 bf16, 32 int8
    R8 = _round_up(R, sub)
    Cp = _round_up(C, 128)
    target_elems = max(sub * 128, _TILE_BYTES // isz)
    # Keep each per-row DMA run >= ~2 KiB unless the whole row is shorter.
    min_tc = min(Cp, _round_up(max(1, 2048 // isz), 128))

    # ---- column tile ----
    if block_cols is not None:
        tc = max(min_tc, _round_up(max(int(block_cols), 128), 128))
    else:
        # Row-tile candidate assuming a <=2048-lane column tile; if rows are
        # scarce, grow tc instead so the tile still fills the byte budget.
        tm_guess = min(R8, 4096,
                       max(sub, (target_elems // min(Cp, 2048)) // sub * sub))
        tc = max(min_tc,
                 min(Cp, _round_up(max(128, target_elems // tm_guess), 128)))

    # ---- row tile ----
    if block_rows is not None:
        tm = min(R8, max(sub, _round_up(int(block_rows), sub)))
    else:
        tm = min(R8, 4096, max(sub, (target_elems // tc) // sub * sub))

    grid_rows = -(-R // tm)
    grid_cols = -(-C // tc)
    mask_rows = (R % tm) != 0
    mask_cols = (C % tc) != 0

    in_bytes_per_elem = pred2.dtype.itemsize + tgt2.dtype.itemsize
    # Note: on v5e (128 MiB VMEM, slower DMA) one could add
    # pipeline_mode=pl.Buffered(3) to the input BlockSpecs; omitted here to
    # keep the footprint safe on v7x's 64 MiB VMEM.
    vmem_needed = (2 * tm * tc * in_bytes_per_elem   # double-buffered inputs
                   + 8 * tc * 4                      # (8, tc) accumulator
                   + 2 * tc * 4                      # partials out buffers
                   + (2 << 20))                      # Mosaic scratch headroom
    vmem_limit = int(min(max(vmem_needed, 4 << 20), 48 << 20))

    kernel = functools.partial(
        _sq_diff_partial_kernel,
        n_rows=R, n_cols=C, tm=tm, tc=tc,
        mask_rows=mask_rows, mask_cols=mask_cols)

    partials = pl.pallas_call(
        kernel,
        out_shape=jax.ShapeDtypeStruct((grid_rows, 1, tc), jnp.float32),
        grid_spec=pltpu.PrefetchScalarGridSpec(
            num_scalar_prefetch=0,
            grid=(grid_rows, grid_cols),
            in_specs=[
                pl.BlockSpec((tm, tc), lambda i, j: (i, j)),
                pl.BlockSpec((tm, tc), lambda i, j: (i, j)),
            ],
            out_specs=pl.BlockSpec((1, 1, tc), lambda i, j: (i, 0, 0)),
            scratch_shapes=[pltpu.VMEM((8, tc), jnp.float32)],
        ),
        compiler_params=pltpu.CompilerParams(
            dimension_semantics=("parallel", "arbitrary"),
            vmem_limit_bytes=vmem_limit),
        cost_estimate=pl.CostEstimate(
            flops=3 * R * C,
            transcendentals=0,
            bytes_accessed=R * C * in_bytes_per_elem + grid_rows * tc * 4),
    )(pred2, tgt2)

    return jnp.sum(partials) / jnp.float32(R * C)


def mse_sip(output, target, mask=None, weights=None,
            block_rows=None, block_cols=None):
    """Pallas equivalent of MSE_SIP.forward.

    output/target: arrays of identical shape.
    mask: optional boolean array over dim 1; True columns are dropped
          (matching output[:, ~mask]).  Shape-changing, so it needs a concrete
          (non-traced) mask and runs in plain JAX; the squared-diff reduction
          hot path runs inside the Pallas kernel.
    weights: accepted and ignored, matching the PyTorch module.
    """
    del weights
    output = jnp.asarray(output)
    target = jnp.asarray(target)
    if mask is not None:
        keep = ~jnp.asarray(mask)
        output = output[:, keep]
        target = target[:, keep]
    if output.size == 0:
        return jnp.array(jnp.nan, dtype=jnp.float32)  # torch mean of empty -> nan

    isz = min(output.dtype.itemsize, target.dtype.itemsize)
    rows, cols = _choose_split(output.shape, isz)   # free reshape, no data copy
    pred2 = output.reshape(rows, cols)
    tgt2 = target.reshape(rows, cols)
    return _mse_mean_2d(pred2, tgt2,
                        block_rows=block_rows, block_cols=block_cols)


if __name__ == "__main__":
    key = jax.random.PRNGKey(0)
    k1, k2, k3, k4, k5, k6, k7, k8 = jax.random.split(key, 8)

    # --- case 1: batch=2, nodes=16, features=32, no mask (auto tiling) ---
    output = jax.random.normal(k1, (2, 16, 32), dtype=jnp.float32)
    target = jax.random.normal(k2, (2, 16, 32), dtype=jnp.float32)
    loss = jax.block_until_ready(mse_sip(output, target))
    ref = jnp.mean((output - target) ** 2)
    assert jnp.allclose(loss, ref, rtol=1e-5, atol=1e-6), (loss, ref)

    # --- case 2: boolean mask over dim 1 (drop every 4th node) ---
    node_mask = (jnp.arange(16) % 4) == 0
    loss_m = jax.block_until_ready(mse_sip(output, target, mask=node_mask))
    keep = ~node_mask
    ref_m = jnp.mean((output[:, keep] - target[:, keep]) ** 2)
    assert jnp.allclose(loss_m, ref_m, rtol=1e-5, atol=1e-6), (loss_m, ref_m)

    # --- case 3: ragged rows AND cols with a multi-block grid on both axes
    #             (forced small tiles -> interior fast path + masked edges) ---
    o3 = jax.random.normal(k3, (20, 1380), dtype=jnp.float32)
    t3 = jax.random.normal(k4, (20, 1380), dtype=jnp.float32)
    loss3 = jax.block_until_ready(
        mse_sip(o3, t3, block_rows=8, block_cols=512))
    ref3 = jnp.mean((o3 - t3) ** 2)
    assert jnp.allclose(loss3, ref3, rtol=1e-5, atol=1e-6), (loss3, ref3)

    # --- case 4: native bf16 inputs streamed without a wrapper cast ---
    o4 = jax.random.normal(k5, (4, 24, 40), dtype=jnp.bfloat16)
    t4 = jax.random.normal(k6, (4, 24, 40), dtype=jnp.bfloat16)
    loss4 = jax.block_until_ready(mse_sip(o4, t4))
    ref4 = jnp.mean((o4.astype(jnp.float32) - t4.astype(jnp.float32)) ** 2)
    assert jnp.allclose(loss4, ref4, rtol=2e-2, atol=2e-3), (loss4, ref4)

    # --- case 5: 3-D input where the balanced split collapses the leading
    #             dims into rows (small batch, many nodes) ---
    o5 = jax.random.normal(k7, (2, 64, 96), dtype=jnp.float32)
    t5 = jax.random.normal(k8, (2, 64, 96), dtype=jnp.float32)
    loss5 = jax.block_until_ready(mse_sip(o5, t5))
    ref5 = jnp.mean((o5 - t5) ** 2)
    assert jnp.allclose(loss5, ref5, rtol=1e-5, atol=1e-6), (loss5, ref5)

    print("KERNEL_OK")
</pallas_src>

<mosaic_0001>
module attributes {stable_mosaic.version = 11 : i64} {
  func.func @_sq_diff_partial_kernel(%arg0: i32, %arg1: i32, %arg2: memref<8x512xf32, #tpu.memory_space<vmem>>, %arg3: memref<8x512xf32, #tpu.memory_space<vmem>>, %arg4: memref<1x1x512xf32, #tpu.memory_space<vmem>>, %arg5: memref<8x512xf32, #tpu.memory_space<vmem>>) attributes {dimension_semantics = [#tpu.dimension_semantics<parallel>, #tpu.dimension_semantics<arbitrary>], iteration_bounds = array<i64: 1, 1>, scalar_prefetch = 0 : i64, scratch_operands = 1 : i64, tpu.core_type = #tpu.core_type<tc>, window_params = [{transform_indices = @transform_0, window_bounds = array<i64: 8, 512>}, {transform_indices = @transform_1, window_bounds = array<i64: 8, 512>}, {transform_indices = @transform_2, window_bounds = array<i64: 1, 1, 512>}]} {
    %c0_i32 = arith.constant 0 : i32
    %0 = arith.cmpi eq, %arg1, %c0_i32 : i32
    %1 = arith.extui %0 : i1 to i32
    %c0_i32_0 = arith.constant 0 : i32
    %2 = arith.cmpi ne, %1, %c0_i32_0 : i32
    scf.if %2 {
      %cst = arith.constant 0.000000e+00 : f32
      %16 = vector.broadcast %cst : f32 to vector<8x512xf32>
      %c0_9 = arith.constant 0 : index
      %c0_10 = arith.constant 0 : index
      %17 = vector.load %arg5[%c0_9, %c0_10] : memref<8x512xf32, #tpu.memory_space<vmem>>, vector<8x512xf32>
      tpu.vector_store %arg5[%c0_9, %c0_10], %16 {strides = array<i32>} : memref<8x512xf32, #tpu.memory_space<vmem>>, vector<8x512xf32>,
    } else {
    }
    %c0 = arith.constant 0 : index
    %c0_1 = arith.constant 0 : index
    %3 = vector.load %arg2[%c0, %c0_1] : memref<8x512xf32, #tpu.memory_space<vmem>>, vector<8x512xf32>
    %c0_2 = arith.constant 0 : index
    %c0_3 = arith.constant 0 : index
    %4 = vector.load %arg3[%c0_2, %c0_3] : memref<8x512xf32, #tpu.memory_space<vmem>>, vector<8x512xf32>
    %5 = arith.subf %3, %4 : vector<8x512xf32>
    %6 = arith.mulf %5, %5 : vector<8x512xf32>
    %c0_i32_4 = arith.constant 0 : i32
    %7 = arith.cmpi eq, %arg0, %c0_i32_4 : i32
    %8 = arith.extui %7 : i1 to i32
    %c0_i32_5 = arith.constant 0 : i32
    %9 = arith.cmpi ne, %8, %c0_i32_5 : i32
    scf.if %9 {
      %c8_i32 = arith.constant 8 : i32
      %16 = arith.muli %arg0, %c8_i32 : i32
      %17 = tpu.iota {dimensions = array<i32: 0>} : vector<8x512xi32>
      %18 = vector.broadcast %16 : i32 to vector<8x512xi32>
      %19 = arith.addi %18, %17 : vector<8x512xi32>
      %c2_i32 = arith.constant 2 : i32
      %20 = vector.broadcast %c2_i32 : i32 to vector<8x512xi32>
      %21 = arith.cmpi slt, %19, %20 : vector<8x512xi32>
      %cst = arith.constant 0.000000e+00 : f32
      %22 = vector.broadcast %cst : f32 to vector<8x512xf32>
      %23 = arith.select %21, %6, %22 : vector<8x512xi1>, vector<8x512xf32>
      %c0_9 = arith.constant 0 : index
      %c0_10 = arith.constant 0 : index
      %24 = vector.load %arg5[%c0_9, %c0_10] : memref<8x512xf32, #tpu.memory_space<vmem>>, vector<8x512xf32>
      %25 = vector.shape_cast %23 : vector<8x512xf32> to vector<1x8x512xf32>
      %cst_11 = arith.constant dense<0.000000e+00> : vector<8x512xf32>
      %26 = vector.multi_reduction <add>, %25, %cst_11 [0] : vector<1x8x512xf32> to vector<8x512xf32>
      %27 = arith.addf %24, %26 : vector<8x512xf32>
      %c0_12 = arith.constant 0 : index
      %c0_13 = arith.constant 0 : index
      %28 = vector.load %arg5[%c0_12, %c0_13] : memref<8x512xf32, #tpu.memory_space<vmem>>, vector<8x512xf32>
      tpu.vector_store %arg5[%c0_12, %c0_13], %27 {strides = array<i32>} : memref<8x512xf32, #tpu.memory_space<vmem>>, vector<8x512xf32>,
    } else {
    }
    %true = arith.constant true
    %10 = arith.xori %7, %true : i1
    %11 = arith.extui %10 : i1 to i32
    %c0_i32_6 = arith.constant 0 : i32
    %12 = arith.cmpi ne, %11, %c0_i32_6 : i32
    scf.if %12 {
      %c0_9 = arith.constant 0 : index
      %c0_10 = arith.constant 0 : index
      %16 = vector.load %arg5[%c0_9, %c0_10] : memref<8x512xf32, #tpu.memory_space<vmem>>, vector<8x512xf32>
      %17 = vector.shape_cast %6 : vector<8x512xf32> to vector<1x8x512xf32>
      %cst = arith.constant dense<0.000000e+00> : vector<8x512xf32>
      %18 = vector.multi_reduction <add>, %17, %cst [0] : vector<1x8x512xf32> to vector<8x512xf32>
      %19 = arith.addf %16, %18 : vector<8x512xf32>
      %c0_11 = arith.constant 0 : index
      %c0_12 = arith.constant 0 : index
      %20 = vector.load %arg5[%c0_11, %c0_12] : memref<8x512xf32, #tpu.memory_space<vmem>>, vector<8x512xf32>
      tpu.vector_store %arg5[%c0_11, %c0_12], %19 {strides = array<i32>} : memref<8x512xf32, #tpu.memory_space<vmem>>, vector<8x512xf32>,
    } else {
    }
    %c0_i32_7 = arith.constant 0 : i32
    %13 = arith.cmpi eq, %arg1, %c0_i32_7 : i32
    %14 = arith.extui %13 : i1 to i32
    %c0_i32_8 = arith.constant 0 : i32
    %15 = arith.cmpi ne, %14, %c0_i32_8 : i32
    scf.if %15 {
      %c0_9 = arith.constant 0 : index
      %c0_10 = arith.constant 0 : index
      %16 = vector.load %arg5[%c0_9, %c0_10] : memref<8x512xf32, #tpu.memory_space<vmem>>, vector<8x512xf32>
      %cst = arith.constant dense<0.000000e+00> : vector<512xf32>
      %17 = vector.multi_reduction <add>, %16, %cst [0] : vector<8x512xf32> to vector<512xf32>
      %18 = vector.shape_cast %17 : vector<512xf32> to vector<1x512xf32>
      %19 = vector.shape_cast %18 : vector<1x512xf32> to vector<1x1x512xf32>
      %c0_11 = arith.constant 0 : index
      %c0_12 = arith.constant 0 : index
      %c0_13 = arith.constant 0 : index
      %20 = vector.load %arg4[%c0_11, %c0_12, %c0_13] : memref<1x1x512xf32, #tpu.memory_space<vmem>>, vector<1x1x512xf32>
      tpu.vector_store %arg4[%c0_11, %c0_12, %c0_13], %19 {strides = array<i32>} : memref<1x1x512xf32, #tpu.memory_space<vmem>>, vector<1x1x512xf32>,
    } else {
    }
    return
  }
  func.func @transform_0(%arg0: i32, %arg1: i32) -> (i32, i32) {
    %c0_i32 = arith.constant 0 : i32
    return %arg0, %arg1 : i32, i32
  }
  func.func @transform_1(%arg0: i32, %arg1: i32) -> (i32, i32) {
    %c0_i32 = arith.constant 0 : i32
    return %arg0, %arg1 : i32, i32
  }
  func.func @transform_2(%arg0: i32, %arg1: i32) -> (i32, i32, i32) {
    %c0_i32 = arith.constant 0 : i32
    %c0_i32_0 = arith.constant 0 : i32
    %c0_i32_1 = arith.constant 0 : i32
    return %arg0, %c0_i32, %c0_i32_0 : i32, i32, i32
  }
}

</mosaic_0001>

<llo_original>
// kernel: _mse_mean_2d.1
$region0: #{_mse_mean_2d.1}
  #allocation0 [shape = 'u32[]', space=smem, size = 0x4, offset = 0x4, fixed_abs, tag = 'smem constant byte address 0x4 - core index']
  #allocation1 [shape = 'u32[144,128]{1,0:T(1,128)}', space=vmem, size = 0x12000, scoped, tag = 'internal scratch']
  #allocation2 [shape = 'f32[8,512]{1,0:T(8,128)}', space=vmem, size = 0x4000, scoped, tag = 'scratch operand']
  %s0 = inlined_call_operand.hbm [shape: f32[2,512], index: 0, kind: input, shape index: {}]
  %s1 = inlined_call_operand.hbm [shape: f32[2,512], index: 1, kind: input, shape index: {}]
  %s2 = inlined_call_operand.vmem [shape: f32[1,1,512], index: 2, kind: output, shape index: {}]
  %s3 = sld [smem:[#allocation0]]
  $region42: #{_mse_mean_2d.1} parent=0
    _
  %s5 = ssub.s32 1, %s3
  %s6 = scalar_select 0, %s5, %s3
  $region1: #{_mse_mean_2d.1} parent=0
    #allocation3 [shape = 'u8[16384]{0}', space=vmem, size = 0x4000, scoped, tag = 'input window, operand 0, single buffered']
    #allocation4 [shape = 's32[1]{0}', space=sflag, size = 0x4, scoped, tag = 'scoped memory for _mse_mean_2d.1']
    #allocation5 [shape = 'u8[16384]{0}', space=vmem, size = 0x4000, scoped, tag = 'input window, operand 1, single buffered']
    #allocation6 [shape = 's32[1]{0}', space=sflag, size = 0x4, scoped, tag = 'scoped memory for _mse_mean_2d.1']
    %7 = vsyncpa [#allocation4], 0
    %8 = vsyncpa [#allocation6], 0
    // Predicated region
    $region2: #{_mse_mean_2d.1} parent=1 // pred_check
      _
    $region3: #{_mse_mean_2d.1} parent=1 // pred_check_branch
      %10 = sbr.rel (0) target = $region5
    $region4: #{_mse_mean_2d.1} parent=1 // pred_region
      %s12 = ssub.s32 512, 128
      %13 = vsyncadd [#allocation4], %s12
      %s14 = sshll.u32 [#allocation3], 4
      %s15 = int_to_ptr.vmem [resolvable:$true] %s14
      %20 = dma.hbm_to_vmem [thread:$0]  %s0, 128, %s15, [#allocation4], 128, 128, 8
    $region5: #{_mse_mean_2d.1} parent=1 // pred_fallthru
      _
    // Predicated region
    $region6: #{_mse_mean_2d.1} parent=1 // pred_check
      _
    $region7: #{_mse_mean_2d.1} parent=1 // pred_check_branch
      %22 = sbr.rel (0) target = $region9
    $region8: #{_mse_mean_2d.1} parent=1 // pred_region
      %s24 = ssub.s32 512, 128
      %25 = vsyncadd [#allocation6], %s24
      %s26 = sshll.u32 [#allocation5], 4
      %s27 = int_to_ptr.vmem [resolvable:$true] %s26
      %32 = dma.hbm_to_vmem [thread:$0]  %s1, 128, %s27, [#allocation6], 128, 128, 8
    $region9: #{_mse_mean_2d.1} parent=1 // pred_fallthru
      _
    // Predicated region
    $region10: #{_mse_mean_2d.1} parent=1 // pred_check
      _
    $region11: #{_mse_mean_2d.1} parent=1 // pred_check_branch
      %34 = sbr.rel (0) target = $region13
    $region12: #{_mse_mean_2d.1} parent=1 // pred_region
      %35 = dma.done [#allocation4], 512
    $region13: #{_mse_mean_2d.1} parent=1 // pred_fallthru
      _
    // Predicated region
    $region14: #{_mse_mean_2d.1} parent=1 // pred_check
      _
    $region15: #{_mse_mean_2d.1} parent=1 // pred_check_branch
      %37 = sbr.rel (0) target = $region17
    $region16: #{_mse_mean_2d.1} parent=1 // pred_region
      %38 = dma.done [#allocation6], 512
    $region17: #{_mse_mean_2d.1} parent=1 // pred_fallthru
      _
    %p39 = scmp.eq.s32.totalorder 0, 0
    // Predicated region
    $region18: #{_mse_mean_2d.1} parent=1 // pred_check
      %p40 = pneg %p39
    $region19: #{_mse_mean_2d.1} parent=1 // pred_check_branch
      %42 = sbr.rel (%p40) target = $region21
    $region20: #{_mse_mean_2d.1} parent=1 // pred_region
      %43 = vst [vmem:[#allocation2] sm:$0xff] 0.0
      %44 = vst [vmem:[#allocation2 + $0x8] sm:$0xff] 0.0
      %45 = vst [vmem:[#allocation2 + $0x10] sm:$0xff] 0.0
      %46 = vst [vmem:[#allocation2 + $0x18] sm:$0xff] 0.0
    $region21: #{_mse_mean_2d.1} parent=1 // pred_fallthru
      _
    %v47 = vld [vmem:[#allocation3] sm:$0xff]
    %v48 = vld [vmem:[#allocation3 + $0x8] sm:$0xff]
    %v49 = vld [vmem:[#allocation3 + $0x10] sm:$0xff]
    %v50 = vld [vmem:[#allocation3 + $0x18] sm:$0xff]
    %v51 = vld [vmem:[#allocation5] sm:$0xff]
    %v52 = vld [vmem:[#allocation5 + $0x8] sm:$0xff]
    %v53 = vld [vmem:[#allocation5 + $0x10] sm:$0xff]
    %v54 = vld [vmem:[#allocation5 + $0x18] sm:$0xff]
    %v55 = vsub.f32 %v47, %v51
    %v56 = vsub.f32 %v48, %v52
    %v57 = vsub.f32 %v49, %v53
    %v58 = vsub.f32 %v50, %v54
    %v59 = vmul.f32 %v55, %v55
    %v60 = vmul.f32 %v56, %v56
    %v61 = vmul.f32 %v57, %v57
    %v62 = vmul.f32 %v58, %v58
    %p63 = scmp.eq.s32.totalorder 0, 0
    // Predicated region
    $region22: #{_mse_mean_2d.1} parent=1 // pred_check
      %p64 = pneg %p63
    $region23: #{_mse_mean_2d.1} parent=1 // pred_check_branch
      %66 = sbr.rel (%p64) target = $region25
    $region24: #{_mse_mean_2d.1} parent=1 // pred_region
      %s67 = smul.u32 0, 8
      %v68 = vlaneseq
      %v69 = vshrl.u32 %v68, 7
      %v70 = vstv %s67
      %v71 = vadd.s32 %v70, %v69
      %vm72 = vcmp.lt.s32.totalorder %v71, 2
      %v77 = vcombine.low %v59, %v60
      %v78 = vcombine.high %v59, %v60
      %v79 = vcombine.low %v61, %v62
      %v80 = vcombine.high %v61, %v62
      %v82 = vunpack.c.l.s4 1983009808
      %v83 = vunpack.c.0.s8 %v82
      %v84 = vlaneseq
      %v85 = vshrl.u32 %v84, 7
      %v86 = vsub.s32 %v83, %v85
      %v87 = vrot.slane %v77, %v86
      %v89 = vunpack.c.l.s4 1983009808
      %v90 = vunpack.c.0.s8 %v89
      %v91 = vlaneseq
      %v92 = vshrl.u32 %v91, 7
      %v93 = vsub.s32 %v90, %v92
      %v94 = vrot.slane %v78, %v93
      %v96 = vunpack.c.l.s4 1983009808
      %v97 = vunpack.c.0.s8 %v96
      %v98 = vlaneseq
      %v99 = vshrl.u32 %v98, 7
      %v100 = vsub.s32 %v97, %v99
      %v101 = vrot.slane %v79, %v100
      %v103 = vunpack.c.l.s4 1983009808
      %v104 = vunpack.c.0.s8 %v103
      %v105 = vlaneseq
      %v106 = vshrl.u32 %v105, 7
      %v107 = vsub.s32 %v104, %v106
      %v108 = vrot.slane %v80, %v107
      %v109 = vcombine.low %v87, %v101
      %v110 = vcombine.high %v87, %v101
      %v111 = vcombine.low %v94, %v108
      %v112 = vcombine.high %v94, %v108
      %v117 = vsel %vm72, %v109, 0.0
      %v118 = vsel %vm72, %v110, 0.0
      %v119 = vsel %vm72, %v111, 0.0
      %v120 = vsel %vm72, %v112, 0.0
      %v121 = vld [vmem:[#allocation2] sm:$0xff]
      %v122 = vld [vmem:[#allocation2 + $0x8] sm:$0xff]
      %v123 = vld [vmem:[#allocation2 + $0x10] sm:$0xff]
      %v124 = vld [vmem:[#allocation2 + $0x18] sm:$0xff]
      %v125 = vadd.f32 %v117, 0.0
      %v126 = vadd.f32 %v118, 0.0
      %v127 = vadd.f32 %v119, 0.0
      %v128 = vadd.f32 %v120, 0.0
      %v129 = vadd.f32 %v121, %v125
      %v130 = vadd.f32 %v122, %v126
      %v131 = vadd.f32 %v123, %v127
      %v132 = vadd.f32 %v124, %v128
      %133 = vst [vmem:[#allocation2] sm:$0xff] %v129
      %134 = vst [vmem:[#allocation2 + $0x8] sm:$0xff] %v130
      %135 = vst [vmem:[#allocation2 + $0x10] sm:$0xff] %v131
      %136 = vst [vmem:[#allocation2 + $0x18] sm:$0xff] %v132
    $region25: #{_mse_mean_2d.1} parent=1 // pred_fallthru
      _
    %p137 = scmp.ne.s32.totalorder 0, 0
    // Predicated region
    $region26: #{_mse_mean_2d.1} parent=1 // pred_check
      %p138 = pneg %p137
    $region27: #{_mse_mean_2d.1} parent=1 // pred_check_branch
      %140 = sbr.rel (%p138) target = $region29
    $region28: #{_mse_mean_2d.1} parent=1 // pred_region
      %v141 = vld [vmem:[#allocation2] sm:$0xff]
      %v142 = vld [vmem:[#allocation2 + $0x8] sm:$0xff]
      %v143 = vld [vmem:[#allocation2 + $0x10] sm:$0xff]
      %v144 = vld [vmem:[#allocation2 + $0x18] sm:$0xff]
      %v145 = vadd.f32 %v59, 0.0
      %v146 = vadd.f32 %v60, 0.0
      %v147 = vadd.f32 %v61, 0.0
      %v148 = vadd.f32 %v62, 0.0
      %v153 = vcombine.low %v145, %v146
      %v154 = vcombine.high %v145, %v146
      %v155 = vcombine.low %v147, %v148
      %v156 = vcombine.high %v147, %v148
      %v158 = vunpack.c.l.s4 1983009808
      %v159 = vunpack.c.0.s8 %v158
      %v160 = vlaneseq
      %v161 = vshrl.u32 %v160, 7
      %v162 = vsub.s32 %v159, %v161
      %v163 = vrot.slane %v153, %v162
      %v165 = vunpack.c.l.s4 1983009808
      %v166 = vunpack.c.0.s8 %v165
      %v167 = vlaneseq
      %v168 = vshrl.u32 %v167, 7
      %v169 = vsub.s32 %v166, %v168
      %v170 = vrot.slane %v154, %v169
      %v172 = vunpack.c.l.s4 1983009808
      %v173 = vunpack.c.0.s8 %v172
      %v174 = vlaneseq
      %v175 = vshrl.u32 %v174, 7
      %v176 = vsub.s32 %v173, %v175
      %v177 = vrot.slane %v155, %v176
      %v179 = vunpack.c.l.s4 1983009808
      %v180 = vunpack.c.0.s8 %v179
      %v181 = vlaneseq
      %v182 = vshrl.u32 %v181, 7
      %v183 = vsub.s32 %v180, %v182
      %v184 = vrot.slane %v156, %v183
      %v185 = vcombine.low %v163, %v177
      %v186 = vcombine.high %v163, %v177
      %v187 = vcombine.low %v170, %v184
      %v188 = vcombine.high %v170, %v184
      %v193 = vadd.f32 %v141, %v185
      %v194 = vadd.f32 %v142, %v186
      %v195 = vadd.f32 %v143, %v187
      %v196 = vadd.f32 %v144, %v188
      %197 = vst [vmem:[#allocation2] sm:$0xff] %v193
      %198 = vst [vmem:[#allocation2 + $0x8] sm:$0xff] %v194
      %199 = vst [vmem:[#allocation2 + $0x10] sm:$0xff] %v195
      %200 = vst [vmem:[#allocation2 + $0x18] sm:$0xff] %v196
    $region29: #{_mse_mean_2d.1} parent=1 // pred_fallthru
      _
    // Predicated region
    $region30: #{_mse_mean_2d.1} parent=1 // pred_check
      %p201 = pneg %p39
    $region31: #{_mse_mean_2d.1} parent=1 // pred_check_branch
      %203 = sbr.rel (%p201) target = $region33
    $region32: #{_mse_mean_2d.1} parent=1 // pred_region
      %v204 = vld [vmem:[#allocation2] sm:$0xff]
      %v205 = vld [vmem:[#allocation2 + $0x8] sm:$0xff]
      %v206 = vld [vmem:[#allocation2 + $0x10] sm:$0xff]
      %v207 = vld [vmem:[#allocation2 + $0x18] sm:$0xff]
      %v208 = vrot.slane %v204, 4
      %v209 = vadd.f32 %v204, %v208
      %v210 = vrot.slane %v209, 2
      %v211 = vadd.f32 %v209, %v210
      %v212 = vrot.slane %v211, 1
      %v213 = vadd.f32 %v211, %v212
      %v214 = vrot.slane %v205, 4
      %v215 = vadd.f32 %v205, %v214
      %v216 = vrot.slane %v215, 2
      %v217 = vadd.f32 %v215, %v216
      %v218 = vrot.slane %v217, 1
      %v219 = vadd.f32 %v217, %v218
      %v220 = vrot.slane %v206, 4
      %v221 = vadd.f32 %v206, %v220
      %v222 = vrot.slane %v221, 2
      %v223 = vadd.f32 %v221, %v222
      %v224 = vrot.slane %v223, 1
      %v225 = vadd.f32 %v223, %v224
      %v226 = vrot.slane %v207, 4
      %v227 = vadd.f32 %v207, %v226
      %v228 = vrot.slane %v227, 2
      %v229 = vadd.f32 %v227, %v228
      %v230 = vrot.slane %v229, 1
      %v231 = vadd.f32 %v229, %v230
      %v236 = vcombine.low %v213, %v219
      %v237 = vcombine.low %v225, %v231
      %v239 = vunpack.c.l.s4 1966171168
      %v240 = vunpack.c.0.s8 %v239
      %v241 = vlaneseq
      %v242 = vshrl.u32 %v241, 7
      %v243 = vsub.s32 %v240, %v242
      %v244 = vrot.slane %v236, %v243
      %v246 = vunpack.c.l.s4 1966171168
      %v247 = vunpack.c.0.s8 %v246
      %v248 = vlaneseq
      %v249 = vshrl.u32 %v248, 7
      %v250 = vsub.s32 %v247, %v249
      %v251 = vrot.slane %v237, %v250
      %v252 = vcombine.low %v244, %v251
      %v254 = vunpack.c.l.s4 1966171168
      %v255 = vunpack.c.0.s8 %v254
      %v256 = vlaneseq
      %v257 = vshrl.u32 %v256, 7
      %v258 = vsub.s32 %v255, %v257
      %v259 = vrot.slane %v252, %v258
      %v261 = vlaneseq
      %vm262 = vcmp.ge.s32.totalorder %v261, 0
      %vm263 = vcmp.lt.s32.totalorder %v261, 512
      %vm264 = vmand %vm262, %vm263
      %265 = vst.msk [vmem:[%s2] sm:$0xf] %vm264, %v259
    $region33: #{_mse_mean_2d.1} parent=1 // pred_fallthru
      _
    // Predicated region
    $region34: #{_mse_mean_2d.1} parent=1 // pred_check
      _
    $region35: #{_mse_mean_2d.1} parent=1 // pred_check_branch
      %267 = sbr.rel (0) target = $region37
    $region36: #{_mse_mean_2d.1} parent=1 // pred_region
      _
    $region37: #{_mse_mean_2d.1} parent=1 // pred_fallthru
      _
    // Predicated region
    $region38: #{_mse_mean_2d.1} parent=1 // pred_check
      _
    $region39: #{_mse_mean_2d.1} parent=1 // pred_check_branch
      %269 = sbr.rel (0) target = $region41
    $region40: #{_mse_mean_2d.1} parent=1 // pred_region
      _
    $region41: #{_mse_mean_2d.1} parent=1 // pred_fallthru
      _
    %270 = vsyncpa [#allocation4], 1
    %271 = vsyncpa [#allocation6], 1

</llo_original>
